<compile_context>
chip_gen: v7x
topology: tpu7x:2x2x1
jax: 0.10.0
libtpu: 0.0.40
codegen_flags: <defaults>
</compile_context>

<pallas_src>
import functools

import jax
import jax.numpy as jnp
from jax.experimental import pallas as pl
from jax.experimental.pallas import tpu as pltpu

LANE = 128                 # lane width (last dim of every block)
ACC_ROWS = 8               # sublane granularity for f32 tiles / accumulator rows
MAX_BLOCK_ROWS = 2048      # 2048*128*4B = 1 MiB per f32 input block (v5e/v6e)
MAX_BLOCK_ROWS_V7X = 8192  # 4 MiB per block; 2 in x 2 buf = 16 MiB, fits v7x VMEM


def _num_tensorcores():
    """Best-effort detection of per-chip TensorCore count (2 on v7x-class)."""
    try:
        kind = jax.devices()[0].device_kind.lower()
        if "v7" in kind:
            return 2
    except Exception:
        pass
    return 1


def _focal_bce_kernel(o_ref, t_ref, psum_ref, acc_ref, *,
                      rows, block_rows, steps, aligned, hard_targets):
    """Accumulate per-element BCE into an (8, 128) VMEM accumulator; dump the
    accumulator to this core's partial-sum slab on the last inner step."""
    c = pl.program_id(0)   # core / partial-sum index ("parallel")
    i = pl.program_id(1)   # row-block step within this core ("arbitrary")

    @pl.when(i == 0)
    def _init():
        acc_ref[...] = jnp.zeros_like(acc_ref)

    o = o_ref[...].astype(jnp.float32)
    t = t_ref[...].astype(jnp.float32)

    # PyTorch BCELoss clamps each log term at -100.
    if hard_targets:
        # Hard-label fast path: one log / elem (halves EUP traffic).
        bce_elem = -jnp.maximum(jnp.log(jnp.where(t >= 0.5, o, 1.0 - o)), -100.0)
    else:
        log_o = jnp.maximum(jnp.log(o), -100.0)
        log_1mo = jnp.maximum(jnp.log(1.0 - o), -100.0)
        bce_elem = -(t * log_o + (1.0 - t) * log_1mo)

    def _fold_into_acc(x):
        # (block_rows, 128) -> (block_rows//8, 8, 128): sublane-split at the
        # vreg tile boundary; sum(axis=0) is whole-vreg VALU adds, no XLU.
        acc_ref[...] += x.reshape(block_rows // ACC_ROWS, ACC_ROWS, LANE).sum(axis=0)

    if aligned:
        # Grid divides evenly: every block is fully valid, no masking at all.
        _fold_into_acc(bce_elem)
    else:
        b = c * steps + i                  # global row-block index (small ints)
        valid = rows - b * block_rows      # valid rows in this block (may be <= 0)

        @pl.when(valid >= block_rows)
        def _full_block():
            _fold_into_acc(bce_elem)

        @pl.when(valid < block_rows)
        def _ragged_block():
            # Select (not multiply) so garbage in OOB rows is discarded.
            row = jax.lax.broadcasted_iota(jnp.int32, bce_elem.shape, 0)
            _fold_into_acc(jnp.where(row < valid, bce_elem, 0.0))

    @pl.when(i == steps - 1)
    def _writeback():
        psum_ref[0] = acc_ref[...]


def _bce_sum_jnp(o, t, hard_targets):
    """Tiny jnp epilogue for the < 128-element lane-unaligned remainder."""
    o = o.astype(jnp.float32)
    t = t.astype(jnp.float32)
    if hard_targets:
        return -jnp.sum(jnp.maximum(jnp.log(jnp.where(t >= 0.5, o, 1.0 - o)), -100.0))
    log_o = jnp.maximum(jnp.log(o), -100.0)
    log_1mo = jnp.maximum(jnp.log(1.0 - o), -100.0)
    return -jnp.sum(t * log_o + (1.0 - t) * log_1mo)


def focal_loss_bin(outputs, targets, alpha=0.8, gamma=2.0, smooth=1.0,
                   hard_targets=False):
    """JAX/Pallas equivalent of FocalLossBin.forward (returns a scalar)."""
    del smooth  # unused in the reference forward pass (kept for parity)

    out_flat = outputs.reshape(-1)   # native dtype; cast happens in-kernel
    tgt_flat = targets.reshape(-1)
    n = out_flat.shape[0]

    num_cores = _num_tensorcores()
    max_block_rows = MAX_BLOCK_ROWS_V7X if num_cores > 1 else MAX_BLOCK_ROWS

    rem = n % LANE
    bulk = n - rem
    rows = bulk // LANE

    total = jnp.float32(0.0)

    if rows >= ACC_ROWS:
        if rem == 0:
            o2 = out_flat.reshape(rows, LANE)   # free view, no HBM copy
            t2 = tgt_flat.reshape(rows, LANE)
        else:
            # TODO(synk): lane-unaligned n -- the prefix slice may materialize a
            # copy; a fully copy-free path needs a 1-D / pl.ANY manual-DMA layout.
            o2 = jax.lax.slice(out_flat, (0,), (bulk,)).reshape(rows, LANE)
            t2 = jax.lax.slice(tgt_flat, (0,), (bulk,)).reshape(rows, LANE)

        block_rows = min(max_block_rows, (rows // ACC_ROWS) * ACC_ROWS)
        nb = pl.cdiv(rows, block_rows)            # total row blocks
        steps = pl.cdiv(nb, num_cores)            # blocks per core
        aligned = (rows % block_rows == 0) and (nb % num_cores == 0)

        kernel = functools.partial(
            _focal_bce_kernel, rows=rows, block_rows=block_rows,
            steps=steps, aligned=aligned, hard_targets=hard_targets)

        def in_map(c, i):
            # Clamp so out-of-range trailing blocks (nb % num_cores != 0) keep
            # their DMA in bounds; their contribution is masked to zero.
            return (jnp.minimum(c * steps + i, nb - 1), 0)

        partials = pl.pallas_call(
            kernel,
            out_shape=jax.ShapeDtypeStruct((num_cores, ACC_ROWS, LANE), jnp.float32),
            grid_spec=pltpu.PrefetchScalarGridSpec(
                num_scalar_prefetch=0,
                grid=(num_cores, steps),
                in_specs=[
                    pl.BlockSpec((block_rows, LANE), in_map),
                    pl.BlockSpec((block_rows, LANE), in_map),
                ],
                out_specs=pl.BlockSpec((1, ACC_ROWS, LANE), lambda c, i: (c, 0, 0)),
                scratch_shapes=[pltpu.VMEM((ACC_ROWS, LANE), jnp.float32)],
            ),
            compiler_params=pltpu.CompilerParams(
                dimension_semantics=("parallel", "arbitrary")),
        )(o2, t2)
        total = total + jnp.sum(partials)

    if rem != 0 or rows < ACC_ROWS:
        tail_start = bulk if rows >= ACC_ROWS else 0
        o_tail = jax.lax.slice(out_flat, (tail_start,), (n,))
        t_tail = jax.lax.slice(tgt_flat, (tail_start,), (n,))
        total = total + _bce_sum_jnp(o_tail, t_tail, hard_targets)

    # Focal finalize on the combined sum of all partials (wrapper-side, so the
    # multi-core split stays numerically identical to the single-core path).
    bce = total / n
    one_m = 1.0 - jnp.exp(-bce)
    pow_term = one_m * one_m if float(gamma) == 2.0 else one_m ** gamma
    return alpha * pow_term * bce


def _reference(outputs, targets, alpha=0.8, gamma=2.0):
    o = outputs.reshape(-1).astype(jnp.float32)
    t = targets.reshape(-1).astype(jnp.float32)
    log_o = jnp.maximum(jnp.log(o), -100.0)
    log_1mo = jnp.maximum(jnp.log(1.0 - o), -100.0)
    bce = -jnp.mean(t * log_o + (1.0 - t) * log_1mo)
    return alpha * (1.0 - jnp.exp(-bce)) ** gamma * bce


if __name__ == "__main__":
    key = jax.random.PRNGKey(0)
    k1, k2 = jax.random.split(key)

    # NCHW-style small shapes; outputs are probabilities (as BCELoss expects).
    shape = (2, 4, 16, 16)
    outputs = jax.nn.sigmoid(jax.random.normal(k1, shape, dtype=jnp.float32))
    targets = (jax.random.uniform(k2, shape) > 0.5).astype(jnp.float32)

    loss = focal_loss_bin(outputs, targets, alpha=0.8, gamma=2.0, smooth=1.0)
    loss = jax.block_until_ready(loss)

    ref = _reference(outputs, targets, alpha=0.8, gamma=2.0)
    assert jnp.allclose(loss, ref, rtol=1e-5, atol=1e-6), (loss, ref)

    print("KERNEL_OK")
</pallas_src>

<mosaic_0001>
module attributes {stable_mosaic.version = 11 : i64} {
  func.func @_focal_bce_kernel(%arg0: i32, %arg1: i32, %arg2: memref<16x128xf32, #tpu.memory_space<vmem>>, %arg3: memref<16x128xf32, #tpu.memory_space<vmem>>, %arg4: memref<1x8x128xf32, #tpu.memory_space<vmem>>, %arg5: memref<8x128xf32, #tpu.memory_space<vmem>>) attributes {dimension_semantics = [#tpu.dimension_semantics<parallel>, #tpu.dimension_semantics<arbitrary>], iteration_bounds = array<i64: 1, 1>, scalar_prefetch = 0 : i64, scratch_operands = 1 : i64, tpu.core_type = #tpu.core_type<tc>, window_params = [{transform_indices = @transform_0, window_bounds = array<i64: 16, 128>}, {transform_indices = @transform_1, window_bounds = array<i64: 16, 128>}, {transform_indices = @transform_2, window_bounds = array<i64: 1, 8, 128>}]} {
    %c0_i32 = arith.constant 0 : i32
    %0 = arith.cmpi eq, %arg1, %c0_i32 : i32
    %1 = arith.extui %0 : i1 to i32
    %c0_i32_0 = arith.constant 0 : i32
    %2 = arith.cmpi ne, %1, %c0_i32_0 : i32
    scf.if %2 {
      %cst_15 = arith.constant 0.000000e+00 : f32
      %28 = vector.broadcast %cst_15 : f32 to vector<8x128xf32>
      %c0_16 = arith.constant 0 : index
      %c0_17 = arith.constant 0 : index
      %29 = vector.load %arg5[%c0_16, %c0_17] : memref<8x128xf32, #tpu.memory_space<vmem>>, vector<8x128xf32>
      tpu.vector_store %arg5[%c0_16, %c0_17], %28 {strides = array<i32>} : memref<8x128xf32, #tpu.memory_space<vmem>>, vector<8x128xf32>,
    } else {
    }
    %c0 = arith.constant 0 : index
    %c0_1 = arith.constant 0 : index
    %3 = vector.load %arg2[%c0, %c0_1] : memref<16x128xf32, #tpu.memory_space<vmem>>, vector<16x128xf32>
    %c0_2 = arith.constant 0 : index
    %c0_3 = arith.constant 0 : index
    %4 = vector.load %arg3[%c0_2, %c0_3] : memref<16x128xf32, #tpu.memory_space<vmem>>, vector<16x128xf32>
    %5 = math.log %3 : vector<16x128xf32>
    %cst = arith.constant -1.000000e+02 : f32
    %6 = vector.broadcast %cst : f32 to vector<16x128xf32>
    %7 = arith.maximumf %5, %6 : vector<16x128xf32>
    %cst_4 = arith.constant 1.000000e+00 : f32
    %8 = vector.broadcast %cst_4 : f32 to vector<16x128xf32>
    %9 = arith.subf %8, %3 : vector<16x128xf32>
    %10 = math.log %9 : vector<16x128xf32>
    %cst_5 = arith.constant -1.000000e+02 : f32
    %11 = vector.broadcast %cst_5 : f32 to vector<16x128xf32>
    %12 = arith.maximumf %10, %11 : vector<16x128xf32>
    %13 = arith.mulf %4, %7 : vector<16x128xf32>
    %cst_6 = arith.constant 1.000000e+00 : f32
    %14 = vector.broadcast %cst_6 : f32 to vector<16x128xf32>
    %15 = arith.subf %14, %4 : vector<16x128xf32>
    %16 = arith.mulf %15, %12 : vector<16x128xf32>
    %17 = arith.addf %13, %16 : vector<16x128xf32>
    %cst_7 = arith.constant 0.000000e+00 : f32
    %18 = vector.broadcast %cst_7 : f32 to vector<16x128xf32>
    %19 = arith.subf %18, %17 : vector<16x128xf32>
    %c0_8 = arith.constant 0 : index
    %c0_9 = arith.constant 0 : index
    %20 = vector.load %arg5[%c0_8, %c0_9] : memref<8x128xf32, #tpu.memory_space<vmem>>, vector<8x128xf32>
    %21 = vector.shape_cast %19 : vector<16x128xf32> to vector<2x8x128xf32>
    %cst_10 = arith.constant dense<0.000000e+00> : vector<8x128xf32>
    %22 = vector.multi_reduction <add>, %21, %cst_10 [0] : vector<2x8x128xf32> to vector<8x128xf32>
    %23 = arith.addf %20, %22 : vector<8x128xf32>
    %c0_11 = arith.constant 0 : index
    %c0_12 = arith.constant 0 : index
    %24 = vector.load %arg5[%c0_11, %c0_12] : memref<8x128xf32, #tpu.memory_space<vmem>>, vector<8x128xf32>
    tpu.vector_store %arg5[%c0_11, %c0_12], %23 {strides = array<i32>} : memref<8x128xf32, #tpu.memory_space<vmem>>, vector<8x128xf32>,
    %c0_i32_13 = arith.constant 0 : i32
    %25 = arith.cmpi eq, %arg1, %c0_i32_13 : i32
    %26 = arith.extui %25 : i1 to i32
    %c0_i32_14 = arith.constant 0 : i32
    %27 = arith.cmpi ne, %26, %c0_i32_14 : i32
    scf.if %27 {
      %c0_15 = arith.constant 0 : index
      %c0_16 = arith.constant 0 : index
      %28 = vector.load %arg5[%c0_15, %c0_16] : memref<8x128xf32, #tpu.memory_space<vmem>>, vector<8x128xf32>
      %c0_17 = arith.constant 0 : index
      %c0_18 = arith.constant 0 : index
      %c0_19 = arith.constant 0 : index
      %29 = vector.load %arg4[%c0_17, %c0_18, %c0_19] : memref<1x8x128xf32, #tpu.memory_space<vmem>>, vector<1x8x128xf32>
      %30 = vector.shape_cast %29 : vector<1x8x128xf32> to vector<8x128xf32>
      %31 = vector.shape_cast %28 : vector<8x128xf32> to vector<1x8x128xf32>
      tpu.vector_store %arg4[%c0_17, %c0_18, %c0_19], %31 {strides = array<i32>} : memref<1x8x128xf32, #tpu.memory_space<vmem>>, vector<1x8x128xf32>,
    } else {
    }
    return
  }
  func.func @transform_0(%arg0: i32, %arg1: i32) -> (i32, i32) {
    %c1_i32 = arith.constant 1 : i32
    %0 = arith.muli %arg0, %c1_i32 : i32
    %1 = arith.addi %0, %arg1 : i32
    %c0_i32 = arith.constant 0 : i32
    %2 = arith.minsi %1, %c0_i32 : i32
    %c0_i32_0 = arith.constant 0 : i32
    %c0_i32_1 = arith.constant 0 : i32
    return %2, %c0_i32_0 : i32, i32
  }
  func.func @transform_1(%arg0: i32, %arg1: i32) -> (i32, i32) {
    %c1_i32 = arith.constant 1 : i32
    %0 = arith.muli %arg0, %c1_i32 : i32
    %1 = arith.addi %0, %arg1 : i32
    %c0_i32 = arith.constant 0 : i32
    %2 = arith.minsi %1, %c0_i32 : i32
    %c0_i32_0 = arith.constant 0 : i32
    %c0_i32_1 = arith.constant 0 : i32
    return %2, %c0_i32_0 : i32, i32
  }
  func.func @transform_2(%arg0: i32, %arg1: i32) -> (i32, i32, i32) {
    %c0_i32 = arith.constant 0 : i32
    %c0_i32_0 = arith.constant 0 : i32
    %c0_i32_1 = arith.constant 0 : i32
    return %arg0, %c0_i32, %c0_i32_0 : i32, i32, i32
  }
}

</mosaic_0001>

<llo_original>
// kernel: tpu_custom_call.1
$region0: #{tpu_custom_call.1}
  #allocation0 [shape = 'u32[]', space=smem, size = 0x4, offset = 0x4, fixed_abs, tag = 'smem constant byte address 0x4 - core index']
  #allocation1 [shape = 'u32[144,128]{1,0:T(1,128)}', space=vmem, size = 0x12000, scoped, tag = 'internal scratch']
  #allocation2 [shape = 'f32[8,128]{1,0:T(8,128)}', space=vmem, size = 0x1000, scoped, tag = 'scratch operand']
  %s0 = inlined_call_operand.hbm [shape: f32[16,128], index: 0, kind: input, shape index: {}]
  %s1 = inlined_call_operand.hbm [shape: f32[16,128], index: 1, kind: input, shape index: {}]
  %s2 = inlined_call_operand.hbm [shape: f32[1,8,128], index: 2, kind: output, shape index: {}]
  %s3 = sld [smem:[#allocation0]]
  $region34: #{tpu_custom_call.1} parent=0
    _
  %s5 = ssub.s32 1, %s3
  %s6 = scalar_select 0, %s5, %s3
  $region1: #{tpu_custom_call.1} parent=0
    #allocation3 [shape = 'u8[8192]{0}', space=vmem, size = 0x2000, scoped, tag = 'input window, operand 0, single buffered']
    #allocation4 [shape = 's32[1]{0}', space=sflag, size = 0x4, scoped, tag = 'scoped memory for tpu_custom_call.1']
    #allocation5 [shape = 's32[1]{0}', space=sflag, size = 0x4, scoped, tag = 'scoped memory for tpu_custom_call.1']
    #allocation6 [shape = 'u8[8192]{0}', space=vmem, size = 0x2000, scoped, tag = 'input window, operand 1, single buffered']
    #allocation7 [shape = 's32[1]{0}', space=sflag, size = 0x4, scoped, tag = 'scoped memory for tpu_custom_call.1']
    #allocation8 [shape = 'u8[4096]{0}', space=vmem, size = 0x1000, scoped, tag = 'output window, operand 0, single buffered']
    %7 = vsyncpa [#allocation4], 0
    %8 = vsyncpa [#allocation7], 0
    %9 = vsyncpa [#allocation5], 0
    // Predicated region
    $region2: #{tpu_custom_call.1} parent=1 // pred_check
      _
    $region3: #{tpu_custom_call.1} parent=1 // pred_check_branch
      %11 = sbr.rel (0) target = $region5
    $region4: #{tpu_custom_call.1} parent=1 // pred_region
      %s12 = sadd.s32 0, 0
      %p13 = scmp.lt.s32.totalorder %s12, 0
      %s14 = scalar_select %p13, %s12, 0
      %s15 = smul.u32 2, %s14
      %s17 = ssub.s32 256, 256
      %18 = vsyncadd [#allocation4], %s17
      %s19 = smul.addr %s15, 128
      %s20 = scalar_lea.hbm %s0, %s19
      %s21 = sshll.u32 [#allocation3], 4
      %s22 = int_to_ptr.vmem [resolvable:$true] %s21
      %27 = dma.hbm_to_vmem [thread:$0]  %s20, 256, %s22, [#allocation4], 128, 128, 8
    $region5: #{tpu_custom_call.1} parent=1 // pred_fallthru
      _
    // Predicated region
    $region6: #{tpu_custom_call.1} parent=1 // pred_check
      _
    $region7: #{tpu_custom_call.1} parent=1 // pred_check_branch
      %29 = sbr.rel (0) target = $region9
    $region8: #{tpu_custom_call.1} parent=1 // pred_region
      %s30 = sadd.s32 0, 0
      %p31 = scmp.lt.s32.totalorder %s30, 0
      %s32 = scalar_select %p31, %s30, 0
      %s33 = smul.u32 2, %s32
      %s35 = ssub.s32 256, 256
      %36 = vsyncadd [#allocation7], %s35
      %s37 = smul.addr %s33, 128
      %s38 = scalar_lea.hbm %s1, %s37
      %s39 = sshll.u32 [#allocation6], 4
      %s40 = int_to_ptr.vmem [resolvable:$true] %s39
      %45 = dma.hbm_to_vmem [thread:$0]  %s38, 256, %s40, [#allocation7], 128, 128, 8
    $region9: #{tpu_custom_call.1} parent=1 // pred_fallthru
      _
    // Predicated region
    $region10: #{tpu_custom_call.1} parent=1 // pred_check
      _
    $region11: #{tpu_custom_call.1} parent=1 // pred_check_branch
      %47 = sbr.rel (0) target = $region13
    $region12: #{tpu_custom_call.1} parent=1 // pred_region
      %48 = dma.done [#allocation4], 256
    $region13: #{tpu_custom_call.1} parent=1 // pred_fallthru
      _
    // Predicated region
    $region14: #{tpu_custom_call.1} parent=1 // pred_check
      _
    $region15: #{tpu_custom_call.1} parent=1 // pred_check_branch
      %50 = sbr.rel (0) target = $region17
    $region16: #{tpu_custom_call.1} parent=1 // pred_region
      %51 = dma.done [#allocation7], 256
    $region17: #{tpu_custom_call.1} parent=1 // pred_fallthru
      _
    %s52 = sadd.s32 0, 0
    %p53 = scmp.lt.s32.totalorder %s52, 0
    %s54 = scalar_select %p53, %s52, 0
    %s55 = smul.u32 2, %s54
    %s56 = sadd.s32 0, 0
    %p57 = scmp.lt.s32.totalorder %s56, 0
    %s58 = scalar_select %p57, %s56, 0
    %s59 = smul.u32 2, %s58
    %p60 = scmp.eq.s32.totalorder 0, 0
    // Predicated region
    $region18: #{tpu_custom_call.1} parent=1 // pred_check
      %p61 = pneg %p60
    $region19: #{tpu_custom_call.1} parent=1 // pred_check_branch
      %63 = sbr.rel (%p61) target = $region21
    $region20: #{tpu_custom_call.1} parent=1 // pred_region
      %64 = vst [vmem:[#allocation2] sm:$0xff] 0.0
    $region21: #{tpu_custom_call.1} parent=1 // pred_fallthru
      _
    %v65 = vld [vmem:[#allocation3] sm:$0xff]
    %v66 = vld [vmem:[#allocation3 + $0x8] sm:$0xff]
    %v67 = vld [vmem:[#allocation6] sm:$0xff]
    %v68 = vld [vmem:[#allocation6 + $0x8] sm:$0xff]
    %v69 = vlog2.pop %v65
    %v70 = vmul.f32 %v69, 0.6931472
    %v71 = vlog2.pop %v66
    %v72 = vmul.f32 %v71, 0.6931472
    %v73 = vmax.f32 %v70, -100.0
    %v74 = vmax.f32 %v72, -100.0
    %v75 = vsub.f32 1.0, %v65
    %v76 = vsub.f32 1.0, %v66
    %v77 = vlog2.pop %v75
    %v78 = vmul.f32 %v77, 0.6931472
    %v79 = vlog2.pop %v76
    %v80 = vmul.f32 %v79, 0.6931472
    %v81 = vmax.f32 %v78, -100.0
    %v82 = vmax.f32 %v80, -100.0
    %v83 = vmul.f32 %v67, %v73
    %v84 = vmul.f32 %v68, %v74
    %v85 = vsub.f32 1.0, %v67
    %v86 = vsub.f32 1.0, %v68
    %v87 = vmul.f32 %v85, %v81
    %v88 = vmul.f32 %v86, %v82
    %v89 = vadd.f32 %v83, %v87
    %v90 = vadd.f32 %v84, %v88
    %v91 = vsub.f32 0.0, %v89
    %v92 = vsub.f32 0.0, %v90
    %v93 = vld [vmem:[#allocation2] sm:$0xff]
    %v94 = vadd.f32 %v91, %v92
    %v95 = vadd.f32 %v93, %v94
    %96 = vst [vmem:[#allocation2] sm:$0xff] %v95
    // Predicated region
    $region22: #{tpu_custom_call.1} parent=1 // pred_check
      %p97 = pneg %p60
    $region23: #{tpu_custom_call.1} parent=1 // pred_check_branch
      %99 = sbr.rel (%p97) target = $region25
    $region24: #{tpu_custom_call.1} parent=1 // pred_region
      %v100 = vld [vmem:[#allocation2] sm:$0xff]
      %101 = vst [vmem:[#allocation8] sm:$0xff] %v100
    $region25: #{tpu_custom_call.1} parent=1 // pred_fallthru
      _
    // Predicated region
    $region26: #{tpu_custom_call.1} parent=1 // pred_check
      _
    $region27: #{tpu_custom_call.1} parent=1 // pred_check_branch
      %103 = sbr.rel (0) target = $region29
    $region28: #{tpu_custom_call.1} parent=1 // pred_region
      %s105 = ssub.s32 128, 128
      %106 = vsyncadd [#allocation5], %s105
      %s108 = sshll.u32 [#allocation8], 4
      %s109 = int_to_ptr.vmem [resolvable:$true] %s108
      %111 = dma.vmem_to_hbm [thread:$0]  %s109, 128, %s2, [#allocation5]
    $region29: #{tpu_custom_call.1} parent=1 // pred_fallthru
      _
    // Predicated region
    $region30: #{tpu_custom_call.1} parent=1 // pred_check
      _
    $region31: #{tpu_custom_call.1} parent=1 // pred_check_branch
      %113 = sbr.rel (0) target = $region33
    $region32: #{tpu_custom_call.1} parent=1 // pred_region
      %114 = dma.done [#allocation5], 128
    $region33: #{tpu_custom_call.1} parent=1 // pred_fallthru
      _
    %115 = vsyncpa [#allocation4], 1
    %116 = vsyncpa [#allocation7], 1
    %117 = vsyncpa [#allocation5], 1

</llo_original>
